<compile_context>
chip_gen: v5e
topology: v5e:2x2
jax: 0.10.0
libtpu: 0.0.40
codegen_flags: <defaults>
</compile_context>

<pallas_src>
import functools

import jax
import jax.numpy as jnp
from jax.experimental import pallas as pl
from jax.experimental.pallas import tpu as pltpu

_LANE = 128
_SUBLANE = 8


def _ln_channel_kernel(x_ref, w_ref, b_ref, o_ref, *, eps, inv_c):
    """Blocks: x/o = (1, C, th, W); w/b = (C, 1, 1). Normalize over C per (h, w)."""
    x = x_ref[0].astype(jnp.float32)                 # (C, th, W), f32 stats
    u = jnp.sum(x, axis=0) * inv_c                   # (th, W)   mean over channels
    xc = x - u[None, :, :]                           # centered
    var = jnp.sum(xc * xc, axis=0) * inv_c           # (th, W)   biased variance
    inv = jax.lax.rsqrt(var + eps)                   # EUP
    w = w_ref[...].astype(jnp.float32)               # (C, 1, 1)
    b = b_ref[...].astype(jnp.float32)               # (C, 1, 1)
    o_ref[0] = (xc * (inv[None, :, :] * w) + b).astype(o_ref.dtype)


def _pick_h_tile(C, H, W, itemsize, budget_bytes):
    """Largest multiple-of-8 H tile whose double-buffered in+out blocks fit budget."""
    w_pad = pl.cdiv(W, _LANE) * _LANE                # lane padding of the VMEM block
    bytes_per_row = C * w_pad * itemsize             # one H-row of one buffer
    max_th = max(1, budget_bytes // (4 * bytes_per_row))   # 2 in-bufs + 2 out-bufs
    if max_th >= H or H % _SUBLANE != 0:
        return H                                     # full extent is always legal
    return max(_SUBLANE, (max_th // _SUBLANE) * _SUBLANE)


def layer_norm_channel(x, weight, bias, eps=1e-5, vmem_budget_bytes=8 * 1024 * 1024):
    """x: (N, C, H, W); weight, bias: (C,). Returns (N, C, H, W)."""
    N, C, H, W = x.shape
    assert weight.shape == (C,) and bias.shape == (C,)

    itemsize = jnp.dtype(x.dtype).itemsize
    th = _pick_h_tile(C, H, W, itemsize, vmem_budget_bytes)
    n_h = pl.cdiv(H, th)

    w3 = weight.reshape(C, 1, 1).astype(jnp.float32)
    b3 = bias.reshape(C, 1, 1).astype(jnp.float32)

    kernel = functools.partial(_ln_channel_kernel, eps=float(eps), inv_c=1.0 / C)

    cost = pl.CostEstimate(
        flops=int(7 * N * C * H * W),
        transcendentals=int(N * H * W),
        bytes_accessed=int(2 * N * C * H * W * itemsize + 2 * C * 4),
    )

    return pl.pallas_call(
        kernel,
        out_shape=jax.ShapeDtypeStruct((N, C, H, W), x.dtype),
        grid_spec=pltpu.PrefetchScalarGridSpec(
            num_scalar_prefetch=0,
            grid=(N, n_h),
            in_specs=[
                pl.BlockSpec((1, C, th, W), lambda n, t: (n, 0, t, 0)),
                pl.BlockSpec((C, 1, 1), lambda n, t: (0, 0, 0)),
                pl.BlockSpec((C, 1, 1), lambda n, t: (0, 0, 0)),
            ],
            out_specs=pl.BlockSpec((1, C, th, W), lambda n, t: (n, 0, t, 0)),
        ),
        compiler_params=pltpu.CompilerParams(
            dimension_semantics=("parallel", "parallel")
        ),
        cost_estimate=cost,
    )(x, w3, b3)


def _reference(x, weight, bias, eps=1e-5):
    u = jnp.mean(x, axis=1, keepdims=True)
    s = jnp.mean((x - u) ** 2, axis=1, keepdims=True)
    xn = (x - u) / jnp.sqrt(s + eps)
    return weight[None, :, None, None] * xn + bias[None, :, None, None]


if __name__ == "__main__":
    key = jax.random.PRNGKey(0)
    N, C, H, W = 2, 4, 16, 16
    x = jax.random.normal(key, (N, C, H, W), dtype=jnp.float32)

    # nn.Parameter(torch.ones(C)) / torch.zeros(C)
    weight = jnp.ones((C,), dtype=jnp.float32)
    bias = jnp.zeros((C,), dtype=jnp.float32)

    out = jax.block_until_ready(layer_norm_channel(x, weight, bias, eps=1e-5))
    ref = _reference(x, weight, bias, eps=1e-5)
    assert out.shape == (N, C, H, W)
    assert jnp.allclose(out, ref, atol=1e-5, rtol=1e-5), "mismatch vs reference"

    # PoolFormer-like late stage: W < 128 lanes, H not a multiple of 8 (full-H block).
    x2 = jax.random.normal(jax.random.PRNGKey(1), (2, 8, 7, 7), dtype=jnp.float32)
    w2 = jnp.linspace(0.5, 1.5, 8, dtype=jnp.float32)
    b2 = jnp.linspace(-0.1, 0.1, 8, dtype=jnp.float32)
    out2 = jax.block_until_ready(layer_norm_channel(x2, w2, b2))
    assert jnp.allclose(out2, _reference(x2, w2, b2), atol=1e-5, rtol=1e-5), \
        "mismatch vs reference (small spatial)"

    # Force H-tiling with a non-dividing edge tile (exercises Pallas edge masking).
    x3 = jax.random.normal(jax.random.PRNGKey(2), (1, 8, 40, 64), dtype=jnp.float32)
    wt3 = jnp.linspace(0.8, 1.2, 8, dtype=jnp.float32)
    bs3 = jnp.linspace(-0.2, 0.2, 8, dtype=jnp.float32)
    out3 = jax.block_until_ready(
        layer_norm_channel(x3, wt3, bs3, vmem_budget_bytes=256 * 1024)
    )
    assert jnp.allclose(out3, _reference(x3, wt3, bs3), atol=1e-5, rtol=1e-5), \
        "mismatch vs reference (tiled H with edge block)"

    print("KERNEL_OK")
</pallas_src>

<mosaic_0001>
module attributes {stable_mosaic.version = 11 : i64} {
  func.func @_ln_channel_kernel(%arg0: i32, %arg1: i32, %arg2: memref<1x4x16x16xf32, #tpu.memory_space<vmem>>, %arg3: memref<4x1x1xf32, #tpu.memory_space<vmem>>, %arg4: memref<4x1x1xf32, #tpu.memory_space<vmem>>, %arg5: memref<1x4x16x16xf32, #tpu.memory_space<vmem>>) attributes {dimension_semantics = [#tpu.dimension_semantics<parallel>, #tpu.dimension_semantics<parallel>], iteration_bounds = array<i64: 2, 1>, scalar_prefetch = 0 : i64, scratch_operands = 0 : i64, tpu.core_type = #tpu.core_type<tc>, window_params = [{transform_indices = @transform_0, window_bounds = array<i64: 1, 4, 16, 16>}, {pipeline_mode = #tpu.pipeline_mode<synchronous>, transform_indices = @transform_1, window_bounds = array<i64: 4, 1, 1>}, {pipeline_mode = #tpu.pipeline_mode<synchronous>, transform_indices = @transform_2, window_bounds = array<i64: 4, 1, 1>}, {transform_indices = @transform_3, window_bounds = array<i64: 1, 4, 16, 16>}]} {
    %c0 = arith.constant 0 : index
    %c0_0 = arith.constant 0 : index
    %c0_1 = arith.constant 0 : index
    %c0_2 = arith.constant 0 : index
    %0 = vector.load %arg2[%c0, %c0_0, %c0_1, %c0_2] : memref<1x4x16x16xf32, #tpu.memory_space<vmem>>, vector<1x4x16x16xf32>
    %1 = vector.shape_cast %0 : vector<1x4x16x16xf32> to vector<4x16x16xf32>
    %cst = arith.constant dense<0.000000e+00> : vector<16x16xf32>
    %2 = vector.multi_reduction <add>, %1, %cst [0] : vector<4x16x16xf32> to vector<16x16xf32>
    %cst_3 = arith.constant 2.500000e-01 : f32
    %3 = vector.broadcast %cst_3 : f32 to vector<16x16xf32>
    %4 = arith.mulf %2, %3 : vector<16x16xf32>
    %5 = vector.shape_cast %4 : vector<16x16xf32> to vector<1x16x16xf32>
    %6 = vector.broadcast %5 : vector<1x16x16xf32> to vector<4x16x16xf32>
    %7 = arith.subf %1, %6 : vector<4x16x16xf32>
    %8 = arith.mulf %7, %7 : vector<4x16x16xf32>
    %cst_4 = arith.constant dense<0.000000e+00> : vector<16x16xf32>
    %9 = vector.multi_reduction <add>, %8, %cst_4 [0] : vector<4x16x16xf32> to vector<16x16xf32>
    %cst_5 = arith.constant 2.500000e-01 : f32
    %10 = vector.broadcast %cst_5 : f32 to vector<16x16xf32>
    %11 = arith.mulf %9, %10 : vector<16x16xf32>
    %cst_6 = arith.constant 9.99999974E-6 : f32
    %12 = vector.broadcast %cst_6 : f32 to vector<16x16xf32>
    %13 = arith.addf %11, %12 : vector<16x16xf32>
    %14 = math.rsqrt %13 : vector<16x16xf32>
    %c0_7 = arith.constant 0 : index
    %c0_8 = arith.constant 0 : index
    %c0_9 = arith.constant 0 : index
    %15 = vector.load %arg3[%c0_7, %c0_8, %c0_9] : memref<4x1x1xf32, #tpu.memory_space<vmem>>, vector<4x1x1xf32>
    %c0_10 = arith.constant 0 : index
    %c0_11 = arith.constant 0 : index
    %c0_12 = arith.constant 0 : index
    %16 = vector.load %arg4[%c0_10, %c0_11, %c0_12] : memref<4x1x1xf32, #tpu.memory_space<vmem>>, vector<4x1x1xf32>
    %17 = vector.shape_cast %14 : vector<16x16xf32> to vector<1x16x16xf32>
    %18 = vector.broadcast %17 : vector<1x16x16xf32> to vector<4x16x16xf32>
    %19 = vector.broadcast %15 : vector<4x1x1xf32> to vector<4x16x16xf32>
    %20 = arith.mulf %18, %19 : vector<4x16x16xf32>
    %21 = arith.mulf %7, %20 : vector<4x16x16xf32>
    %22 = vector.broadcast %16 : vector<4x1x1xf32> to vector<4x16x16xf32>
    %23 = arith.addf %21, %22 : vector<4x16x16xf32>
    %c0_13 = arith.constant 0 : index
    %c0_14 = arith.constant 0 : index
    %c0_15 = arith.constant 0 : index
    %c0_16 = arith.constant 0 : index
    %24 = vector.load %arg5[%c0_13, %c0_14, %c0_15, %c0_16] : memref<1x4x16x16xf32, #tpu.memory_space<vmem>>, vector<1x4x16x16xf32>
    %25 = vector.shape_cast %24 : vector<1x4x16x16xf32> to vector<4x16x16xf32>
    %26 = vector.shape_cast %23 : vector<4x16x16xf32> to vector<1x4x16x16xf32>
    tpu.vector_store %arg5[%c0_13, %c0_14, %c0_15, %c0_16], %26 {strides = array<i32>} : memref<1x4x16x16xf32, #tpu.memory_space<vmem>>, vector<1x4x16x16xf32>,
    return
  }
  func.func @transform_0(%arg0: i32, %arg1: i32) -> (i32, i32, i32, i32) {
    %c0_i32 = arith.constant 0 : i32
    %c0_i32_0 = arith.constant 0 : i32
    %c0_i32_1 = arith.constant 0 : i32
    return %arg0, %c0_i32, %arg1, %c0_i32_0 : i32, i32, i32, i32
  }
  func.func @transform_1(%arg0: i32, %arg1: i32) -> (i32, i32, i32) {
    %c0_i32 = arith.constant 0 : i32
    %c0_i32_0 = arith.constant 0 : i32
    %c0_i32_1 = arith.constant 0 : i32
    %c0_i32_2 = arith.constant 0 : i32
    return %c0_i32, %c0_i32_0, %c0_i32_1 : i32, i32, i32
  }
  func.func @transform_2(%arg0: i32, %arg1: i32) -> (i32, i32, i32) {
    %c0_i32 = arith.constant 0 : i32
    %c0_i32_0 = arith.constant 0 : i32
    %c0_i32_1 = arith.constant 0 : i32
    %c0_i32_2 = arith.constant 0 : i32
    return %c0_i32, %c0_i32_0, %c0_i32_1 : i32, i32, i32
  }
  func.func @transform_3(%arg0: i32, %arg1: i32) -> (i32, i32, i32, i32) {
    %c0_i32 = arith.constant 0 : i32
    %c0_i32_0 = arith.constant 0 : i32
    %c0_i32_1 = arith.constant 0 : i32
    return %arg0, %c0_i32, %arg1, %c0_i32_0 : i32, i32, i32, i32
  }
}

</mosaic_0001>

<llo_original>
// kernel: tpu_custom_call.1
$region0: #{tpu_custom_call.1}
  #allocation0 [shape = 'u32[]', space=smem, size = 0x4, offset = 0x4, fixed_abs, tag = 'smem constant byte address 0x4 - core index']
  #allocation1 [shape = 'u32[72,128]{1,0:T(1,128)}', space=vmem, size = 0x9000, scoped, tag = 'internal scratch']
  %s0 = inlined_call_operand.hbm [shape: f32[2,4,16,16], index: 0, kind: input, shape index: {}]
  %s1 = inlined_call_operand.vmem [shape: f32[4,1,1], index: 1, kind: input, shape index: {}]
  %s2 = inlined_call_operand.vmem [shape: f32[4,1,1], index: 2, kind: input, shape index: {}]
  %s3 = inlined_call_operand.hbm [shape: f32[2,4,16,16], index: 3, kind: output, shape index: {}]
  %s4 = sld [smem:[#allocation0]]
  $region49: #{tpu_custom_call.1} parent=0
    _
  %s6 = ssub.s32 1, %s4
  %s7 = scalar_select 0, %s6, %s4
  $region1: #{tpu_custom_call.1} parent=0
    #allocation2 [shape = 'u8[65536]{0}', space=vmem, size = 0x10000, scoped, tag = 'input window, operand 0']
    #allocation3 [shape = 's32[2]{0}', space=sflag, size = 0x8, scoped, tag = 'scoped memory for tpu_custom_call.1']
    #allocation4 [shape = 's32[2]{0}', space=sflag, size = 0x8, scoped, tag = 'scoped memory for tpu_custom_call.1']
    #allocation5 [shape = 'u8[65536]{0}', space=vmem, size = 0x10000, scoped, tag = 'output window, operand 0']
    %8 = vsyncpa [#allocation3], 0
    %s9 = scalar_lea.sflag [#allocation3], 1
    %10 = vsyncpa %s9, 0
    %11 = vsyncpa [#allocation4], 0
    %s12 = scalar_lea.sflag [#allocation4], 1
    %13 = vsyncpa %s12, 0
    loop: start=0, step=1, limit=4
    $region2: #{tpu_custom_call.1} parent=1 // loop_pre_header
      _
    $region3: #{tpu_custom_call.1} parent=1 // loop_header
      %s15 = sphi 0, %s19
      %p16 = scmp.ge.s32.totalorder %s15, 4
      %s22 = sphi 0, %s34
      %s23 = sphi 0, %s30
      %s24 = sphi 0, %s22
      %s25 = sphi 0, %s23
      %s26 = sphi 0, %s24
      %s27 = sphi 0, %s25
      %s39 = sphi 0, %s41
      %s42 = sphi 0, %s39
      %s43 = sphi 0, %s42
      %s59 = sphi 0, %s43
      %s63 = sphi 0, %s63
      %s65 = sphi 0, %s63
      %s66 = sphi 0, %s65
      %s80 = sphi 0, %s66
      %s84 = sphi 0, %s84
      %s86 = sphi 0, %s84
      %s87 = sphi 0, %s86
      %s101 = sphi 0, %s87
      %s109 = sphi 0, %s111
      %s112 = sphi 0, %s109
      %s113 = sphi 0, %s112
      %s129 = sphi 0, %s113
    $region4: #{tpu_custom_call.1} parent=1 // loop_header_branch
      %18 = sbr.rel (%p16) target = $region8
    $region5: #{tpu_custom_call.1} parent=1 // loop_body
      %s20 = ssub.s32 %s15, 1
      %s21 = ssub.s32 %s15, 2
      %s28 = sadd.s32 1, %s23
      %p29 = scmp.ge.s32.totalorder %s28, 1
      %s30 = scalar_select %p29, 0, %s28
      %s31 = sadd.s32 1, %s22
      %s32 = scalar_select %p29, %s31, %s22
      %p33 = scmp.ge.s32.totalorder %s32, 2
      %s34 = scalar_select %p33, 0, %s32
      %s35 = ssub.s32 %s22, %s34
      %s36 = ssub.s32 %s23, %s30
      %s37 = sor.u32 %s35, %s36
      %p38 = scmp.eq.s32.totalorder %s37, 0
      %s40 = sadd.s32 %s39, 1
      %s41 = scalar_select %p38, %s39, %s40
      %p44 = pneg %p38
      %p45 = scmp.eq.s32.totalorder %s15, 1
      %p46 = por %p44, %p45
      %p47 = scmp.ne.s32.totalorder %s39, %s42
      %p48 = scmp.eq.s32.totalorder %s15, 0
      %p49 = por %p47, %p48
      %p50 = scmp.ne.s32.totalorder %s39, %s42
      %p51 = scmp.eq.s32.totalorder %s20, 1
      %p52 = por %p50, %p51
      %p53 = scmp.ne.s32.totalorder %s42, %s43
      %p54 = scmp.eq.s32.totalorder %s20, 0
      %p55 = por %p53, %p54
      %p56 = scmp.ne.s32.totalorder %s42, %s43
      %p57 = scmp.eq.s32.totalorder %s21, 1
      %p58 = por %p56, %p57
      %p60 = scmp.ne.s32.totalorder %s43, %s59
      %p61 = scmp.eq.s32.totalorder %s21, 0
      %p62 = por %p60, %p61
      %s64 = sadd.s32 %s63, 1
      %p67 = scmp.eq.s32.totalorder %s15, 1
      %p68 = scmp.ne.s32.totalorder %s63, %s65
      %p69 = scmp.eq.s32.totalorder %s15, 0
      %p70 = por %p68, %p69
      %p71 = scmp.ne.s32.totalorder %s63, %s65
      %p72 = scmp.eq.s32.totalorder %s20, 1
      %p73 = por %p71, %p72
      %p74 = scmp.ne.s32.totalorder %s65, %s66
      %p75 = scmp.eq.s32.totalorder %s20, 0
      %p76 = por %p74, %p75
      %p77 = scmp.ne.s32.totalorder %s65, %s66
      %p78 = scmp.eq.s32.totalorder %s21, 1
      %p79 = por %p77, %p78
      %p81 = scmp.ne.s32.totalorder %s66, %s80
      %p82 = scmp.eq.s32.totalorder %s21, 0
      %p83 = por %p81, %p82
      %s85 = sadd.s32 %s84, 1
      %p88 = scmp.eq.s32.totalorder %s15, 1
      %p89 = scmp.ne.s32.totalorder %s84, %s86
      %p90 = scmp.eq.s32.totalorder %s15, 0
      %p91 = por %p89, %p90
      %p92 = scmp.ne.s32.totalorder %s84, %s86
      %p93 = scmp.eq.s32.totalorder %s20, 1
      %p94 = por %p92, %p93
      %p95 = scmp.ne.s32.totalorder %s86, %s87
      %p96 = scmp.eq.s32.totalorder %s20, 0
      %p97 = por %p95, %p96
      %p98 = scmp.ne.s32.totalorder %s86, %s87
      %p99 = scmp.eq.s32.totalorder %s21, 1
      %p100 = por %p98, %p99
      %p102 = scmp.ne.s32.totalorder %s87, %s101
      %p103 = scmp.eq.s32.totalorder %s21, 0
      %p104 = por %p102, %p103
      %s105 = ssub.s32 %s22, %s34
      %s106 = ssub.s32 %s23, %s30
      %s107 = sor.u32 %s105, %s106
      %p108 = scmp.eq.s32.totalorder %s107, 0
      %s110 = sadd.s32 %s109, 1
      %s111 = scalar_select %p108, %s109, %s110
      %p114 = pneg %p108
      %p115 = scmp.eq.s32.totalorder %s15, 1
      %p116 = por %p114, %p115
      %p117 = scmp.ne.s32.totalorder %s109, %s112
      %p118 = scmp.eq.s32.totalorder %s15, 0
      %p119 = por %p117, %p118
      %p120 = scmp.ne.s32.totalorder %s109, %s112
      %p121 = scmp.eq.s32.totalorder %s20, 1
      %p122 = por %p120, %p121
      %p123 = scmp.ne.s32.totalorder %s112, %s113
      %p124 = scmp.eq.s32.totalorder %s20, 0
      %p125 = por %p123, %p124
      %p126 = scmp.ne.s32.totalorder %s112, %s113
      %p127 = scmp.eq.s32.totalorder %s21, 1
      %p128 = por %p126, %p127
      %p130 = scmp.ne.s32.totalorder %s113, %s129
      %p131 = scmp.eq.s32.totalorder %s21, 0
      %p132 = por %p130, %p131
      %p133 = scmp.le.s32.totalorder 1, %s15
      %p134 = scmp.lt.s32.totalorder %s15, 3
      %p135 = pnand %p133, %p134
      %p136 = pneg %p135
      // Predicated region
      $region9: #{tpu_custom_call.1} parent=5 // pred_check
        _
      $region10: #{tpu_custom_call.1} parent=5 // pred_check_branch
        %138 = sbr.rel (%p135) target = $region12
      $region11: #{tpu_custom_call.1} parent=5 // pred_region
        %s139 = ssub.s32 %s15, 1
        // Predicated region
        $region13: #{tpu_custom_call.1} parent=11 // pred_check
          %p140 = pneg %p76
        $region14: #{tpu_custom_call.1} parent=11 // pred_check_branch
          %142 = sbr.rel (%p140) target = $region16
        $region15: #{tpu_custom_call.1} parent=11 // pred_region
          _
        $region16: #{tpu_custom_call.1} parent=11 // pred_fallthru
          _
        // Predicated region
        $region17: #{tpu_custom_call.1} parent=11 // pred_check
          %p143 = pneg %p97
        $region18: #{tpu_custom_call.1} parent=11 // pred_check_branch
          %145 = sbr.rel (%p143) target = $region20
        $region19: #{tpu_custom_call.1} parent=11 // pred_region
          _
        $region20: #{tpu_custom_call.1} parent=11 // pred_fallthru
          _
      $region12: #{tpu_custom_call.1} parent=5 // pred_fallthru
        _
      %p146 = scmp.lt.s32.totalorder %s15, 2
      // Predicated region
      $region21: #{tpu_custom_call.1} parent=5 // pred_check
        %p147 = pneg %p146
      $region22: #{tpu_custom_call.1} parent=5 // pred_check_branch
        %149 = sbr.rel (%p147) target = $region24
      $region23: #{tpu_custom_call.1} parent=5 // pred_region
        // Predicated region
        $region25: #{tpu_custom_call.1} parent=23 // pred_check
          %p150 = pneg %p49
        $region26: #{tpu_custom_call.1} parent=23 // pred_check_branch
          %152 = sbr.rel (%p150) target = $region28
        $region27: #{tpu_custom_call.1} parent=23 // pred_region
          %s153 = sand.u32 %s39, 1
          %s154 = scalar_lea.sflag [#allocation3], %s153
          %s155 = sand.u32 %s39, 1
          %s156 = smul.addr %s155, 64
          %s157 = scalar_lea.vmem [#allocation2], %s156
          %s158 = smul.u32 2, %s23
          %160 = vsyncadd %s154, 0
          %s161 = smul.addr %s22, 8
          %s162 = sadd.s32 %s158, %s161
          %s163 = smul.addr %s162, 8
          %s164 = scalar_lea.hbm %s0, %s163
          %s165 = sshll.u32 %s164, 4
          %s166 = int_to_ptr.hbm [resolvable:$true] %s165
          %s167 = sshll.u32 %s157, 4
          %s168 = int_to_ptr.vmem [resolvable:$true] %s167
          %173 = dma.hbm_to_vmem [thread:$0]  %s166, 1024, %s168, %s154, 128, 128, 8
        $region28: #{tpu_custom_call.1} parent=23 // pred_fallthru
          _
      $region24: #{tpu_custom_call.1} parent=5 // pred_fallthru
        _
      %p174 = scmp.le.s32.totalorder 1, %s15
      %p175 = scmp.lt.s32.totalorder %s15, 3
      %p176 = pnand %p174, %p175
      %p177 = pneg %p176
      // Predicated region
      $region29: #{tpu_custom_call.1} parent=5 // pred_check
        _
      $region30: #{tpu_custom_call.1} parent=5 // pred_check_branch
        %179 = sbr.rel (%p176) target = $region32
      $region31: #{tpu_custom_call.1} parent=5 // pred_region
        %s180 = ssub.s32 %s15, 1
        %s181 = sand.u32 %s42, 1
        %s182 = scalar_lea.sflag [#allocation3], %s181
        %s183 = sand.u32 %s42, 1
        %s184 = smul.addr %s183, 64
        %s185 = scalar_lea.vmem [#allocation2], %s184
        // Predicated region
        $region33: #{tpu_custom_call.1} parent=31 // pred_check
          %p186 = pneg %p55
        $region34: #{tpu_custom_call.1} parent=31 // pred_check_branch
          %188 = sbr.rel (%p186) target = $region36
        $region35: #{tpu_custom_call.1} parent=31 // pred_region
          %190 = dma.done %s182, 1024
        $region36: #{tpu_custom_call.1} parent=31 // pred_fallthru
          _
        %s191 = sand.u32 %s42, 1
        %s192 = scalar_lea.sflag [#allocation3], %s191
        %s193 = sand.u32 %s42, 1
        %s194 = smul.addr %s193, 64
        %s195 = scalar_lea.vmem [#allocation2], %s194
        %p196 = pneg %p55
        %p197 = pneg %p52
        %p198 = pneg %p76
        %p199 = pneg %p73
        %p200 = pneg %p97
        %p201 = pneg %p94
        %p202 = pneg %p125
        %p203 = pneg %p122
        %s204 = sand.u32 %s112, 1
        %s205 = scalar_lea.sflag [#allocation4], %s204
        %s206 = sand.u32 %s112, 1
        %s207 = smul.addr %s206, 64
        %s208 = scalar_lea.vmem [#allocation5], %s207
        %s209 = smul.u32 2, %s25
        %s210 = smul.u32 2, %s25
        %v211 = vld [vmem:[%s185] sm:$0xff]
        %v212 = vld [vmem:[%s185 + $0x8] sm:$0xff]
        %v213 = vld [vmem:[%s185 + $0x10] sm:$0xff]
        %v214 = vld [vmem:[%s185 + $0x18] sm:$0xff]
        %v215 = vld [vmem:[%s185 + $0x20] sm:$0xff]
        %v216 = vld [vmem:[%s185 + $0x28] sm:$0xff]
        %v217 = vld [vmem:[%s185 + $0x30] sm:$0xff]
        %v218 = vld [vmem:[%s185 + $0x38] sm:$0xff]
        %vm219 = vcmask 130048
        %v220 = vsel %vm219, %v211, 0.0
        %v221 = vsel %vm219, %v213, 0.0
        %v222 = vadd.f32 %v220, %v221
        %v223 = vsel %vm219, %v215, 0.0
        %v224 = vadd.f32 %v222, %v223
        %v225 = vsel %vm219, %v217, 0.0
        %v226 = vadd.f32 %v224, %v225
        %v227 = vsel %vm219, %v212, 0.0
        %v228 = vsel %vm219, %v214, 0.0
        %v229 = vadd.f32 %v227, %v228
        %v230 = vsel %vm219, %v216, 0.0
        %v231 = vadd.f32 %v229, %v230
        %v232 = vsel %vm219, %v218, 0.0
        %v233 = vadd.f32 %v231, %v232
        %v234 = vmul.f32 %v226, 0.25
        %v235 = vmul.f32 %v233, 0.25
        %v236 = vsub.f32 %v211, %v234
        %v237 = vsub.f32 %v212, %v235
        %v238 = vsub.f32 %v213, %v234
        %v239 = vsub.f32 %v214, %v235
        %v240 = vsub.f32 %v215, %v234
        %v241 = vsub.f32 %v216, %v235
        %v242 = vsub.f32 %v217, %v234
        %v243 = vsub.f32 %v218, %v235
        %v244 = vmul.f32 %v236, %v236
        %v245 = vmul.f32 %v237, %v237
        %v246 = vmul.f32 %v238, %v238
        %v247 = vmul.f32 %v239, %v239
        %v248 = vmul.f32 %v240, %v240
        %v249 = vmul.f32 %v241, %v241
        %v250 = vmul.f32 %v242, %v242
        %v251 = vmul.f32 %v243, %v243
        %v252 = vsel %vm219, %v244, 0.0
        %v253 = vsel %vm219, %v246, 0.0
        %v254 = vadd.f32 %v252, %v253
        %v255 = vsel %vm219, %v248, 0.0
        %v256 = vadd.f32 %v254, %v255
        %v257 = vsel %vm219, %v250, 0.0
        %v258 = vadd.f32 %v256, %v257
        %v259 = vsel %vm219, %v245, 0.0
        %v260 = vsel %vm219, %v247, 0.0
        %v261 = vadd.f32 %v259, %v260
        %v262 = vsel %vm219, %v249, 0.0
        %v263 = vadd.f32 %v261, %v262
        %v264 = vsel %vm219, %v251, 0.0
        %v265 = vadd.f32 %v263, %v264
        %v266 = vmul.f32 %v258, 0.25
        %v267 = vmul.f32 %v265, 0.25
        %v268 = vadd.f32 %v266, 1e-05
        %v269 = vadd.f32 %v267, 1e-05
        %v270 = vrsqrt.pop %v268
        %v271 = vmul.f32 %v270, %v268
        %v272 = vmul.f32 %v271, %v270
        %v273 = vmul.f32 0.5, %v272
        %v274 = vsub.f32 1.5, %v273
        %v275 = vmul.f32 %v270, %v274
        %vm276 = vweird.f32 %v268
        %vm277 = vweird.f32 %v270
        %vm278 = vmor %vm276, %vm277
        %v279 = vsel %vm278, %v270, %v275
        %v280 = vrsqrt.pop %v269
        %v281 = vmul.f32 %v280, %v269
        %v282 = vmul.f32 %v281, %v280
        %v283 = vmul.f32 0.5, %v282
        %v284 = vsub.f32 1.5, %v283
        %v285 = vmul.f32 %v280, %v284
        %vm286 = vweird.f32 %v269
        %vm287 = vweird.f32 %v280
        %vm288 = vmor %vm286, %vm287
        %v289 = vsel %vm288, %v280, %v285
        %v290 = vld [vmem:[%s1] sm:$0x1]
        %v291 = vld [vmem:[%s1 + $0x1] sm:$0x1]
        %v292 = vld [vmem:[%s1 + $0x2] sm:$0x1]
        %v293 = vld [vmem:[%s1 + $0x3] sm:$0x1]
        %v294 = vld [vmem:[%s2] sm:$0x1]
        %v295 = vld [vmem:[%s2 + $0x1] sm:$0x1]
        %v296 = vld [vmem:[%s2 + $0x2] sm:$0x1]
        %v297 = vld [vmem:[%s2 + $0x3] sm:$0x1]
        %v302 = vperm.slane %v290, 0
        %v303 = vperm.slane %v291, 0
        %v304 = vperm.slane %v292, 0
        %v305 = vperm.slane %v293, 0
        %306 = vset.pattern.permute.xlu0 0
        %307 = vperm.xlu0 %306, %v302
        %v308 = vpop.permute.xlu0 %307
        %310 = vset.pattern.permute.xlu0 0
        %311 = vperm.xlu0 %310, %v303
        %v312 = vpop.permute.xlu0 %311
        %314 = vset.pattern.permute.xlu0 0
        %315 = vperm.xlu0 %314, %v304
        %v316 = vpop.permute.xlu0 %315
        %318 = vset.pattern.permute.xlu0 0
        %319 = vperm.xlu0 %318, %v305
        %v320 = vpop.permute.xlu0 %319
        %v322 = vmul.f32 %v279, %v308
        %v323 = vmul.f32 %v289, %v308
        %v324 = vmul.f32 %v279, %v312
        %v325 = vmul.f32 %v289, %v312
        %v326 = vmul.f32 %v279, %v316
        %v327 = vmul.f32 %v289, %v316
        %v328 = vmul.f32 %v279, %v320
        %v329 = vmul.f32 %v289, %v320
        %v330 = vmul.f32 %v236, %v322
        %v331 = vmul.f32 %v237, %v323
        %v332 = vmul.f32 %v238, %v324
        %v333 = vmul.f32 %v239, %v325
        %v334 = vmul.f32 %v240, %v326
        %v335 = vmul.f32 %v241, %v327
        %v336 = vmul.f32 %v242, %v328
        %v337 = vmul.f32 %v243, %v329
        %v342 = vperm.slane %v294, 0
        %v343 = vperm.slane %v295, 0
        %v344 = vperm.slane %v296, 0
        %v345 = vperm.slane %v297, 0
        %346 = vset.pattern.permute.xlu0 0
        %347 = vperm.xlu0 %346, %v342
        %v348 = vpop.permute.xlu0 %347
        %350 = vset.pattern.permute.xlu0 0
        %351 = vperm.xlu0 %350, %v343
        %v352 = vpop.permute.xlu0 %351
        %354 = vset.pattern.permute.xlu0 0
        %355 = vperm.xlu0 %354, %v344
        %v356 = vpop.permute.xlu0 %355
        %358 = vset.pattern.permute.xlu0 0
        %359 = vperm.xlu0 %358, %v345
        %v360 = vpop.permute.xlu0 %359
        %v362 = vadd.f32 %v330, %v348
        %v363 = vadd.f32 %v331, %v348
        %v364 = vadd.f32 %v332, %v352
        %v365 = vadd.f32 %v333, %v352
        %v366 = vadd.f32 %v334, %v356
        %v367 = vadd.f32 %v335, %v356
        %v368 = vadd.f32 %v336, %v360
        %v369 = vadd.f32 %v337, %v360
        %370 = vst.msk [vmem:[%s208] sm:$0xff] %vm219, %v362
        %371 = vst.msk [vmem:[%s208 + $0x8] sm:$0xff] %vm219, %v363
        %372 = vst.msk [vmem:[%s208 + $0x10] sm:$0xff] %vm219, %v364
        %373 = vst.msk [vmem:[%s208 + $0x18] sm:$0xff] %vm219, %v365
        %374 = vst.msk [vmem:[%s208 + $0x20] sm:$0xff] %vm219, %v366
        %375 = vst.msk [vmem:[%s208 + $0x28] sm:$0xff] %vm219, %v367
        %376 = vst.msk [vmem:[%s208 + $0x30] sm:$0xff] %vm219, %v368
        %377 = vst.msk [vmem:[%s208 + $0x38] sm:$0xff] %vm219, %v369
        %s378 = sand.u32 %s112, 1
        %s379 = scalar_lea.sflag [#allocation4], %s378
        %s380 = sand.u32 %s112, 1
        %s381 = smul.addr %s380, 64
        %s382 = scalar_lea.vmem [#allocation5], %s381
        // Predicated region
        $region37: #{tpu_custom_call.1} parent=31 // pred_check
          %p383 = pneg %p122
        $region38: #{tpu_custom_call.1} parent=31 // pred_check_branch
          %385 = sbr.rel (%p383) target = $region40
        $region39: #{tpu_custom_call.1} parent=31 // pred_region
          %s386 = smul.u32 2, %s25
          %388 = vsyncadd %s379, 0
          %s389 = smul.addr %s24, 8
          %s390 = sadd.s32 %s386, %s389
          %s391 = smul.addr %s390, 8
          %s392 = scalar_lea.hbm %s3, %s391
          %s393 = sshll.u32 %s382, 4
          %s394 = int_to_ptr.vmem [resolvable:$true] %s393
          %s395 = sshll.u32 %s392, 4
          %s396 = int_to_ptr.hbm [resolvable:$true] %s395
          %401 = dma.vmem_to_hbm [thread:$0]  %s394, 1024, %s396, %s379, 128, 128, 8
        $region40: #{tpu_custom_call.1} parent=31 // pred_fallthru
          _
      $region32: #{tpu_custom_call.1} parent=5 // pred_fallthru
        _
      %p402 = scmp.le.s32.totalorder 2, %s15
      // Predicated region
      $region41: #{tpu_custom_call.1} parent=5 // pred_check
        %p403 = pneg %p402
      $region42: #{tpu_custom_call.1} parent=5 // pred_check_branch
        %405 = sbr.rel (%p403) target = $region44
      $region43: #{tpu_custom_call.1} parent=5 // pred_region
        %s406 = ssub.s32 %s15, 2
        // Predicated region
        $region45: #{tpu_custom_call.1} parent=43 // pred_check
          %p407 = pneg %p128
        $region46: #{tpu_custom_call.1} parent=43 // pred_check_branch
          %409 = sbr.rel (%p407) target = $region48
        $region47: #{tpu_custom_call.1} parent=43 // pred_region
          %s410 = sand.u32 %s113, 1
          %s411 = scalar_lea.sflag [#allocation4], %s410
          %s412 = sand.u32 %s113, 1
          %s413 = smul.addr %s412, 64
          %s414 = scalar_lea.vmem [#allocation5], %s413
          %416 = dma.done %s411, 1024
        $region48: #{tpu_custom_call.1} parent=43 // pred_fallthru
          _
      $region44: #{tpu_custom_call.1} parent=5 // pred_fallthru
        _
    $region6: #{tpu_custom_call.1} parent=1 // loop_footer
      %s19 = sadd.s32 1, %s15
    $region7: #{tpu_custom_call.1} parent=1 // loop_footer_branch
      %14 = sbr.rel target = $region3
    $region8: #{tpu_custom_call.1} parent=1 // loop_exit
      _
    %417 = vsyncpa [#allocation3], 1
    %s418 = scalar_lea.sflag [#allocation3], 1
    %419 = vsyncpa %s418, 1
    %420 = vsyncpa [#allocation4], 1
    %s421 = scalar_lea.sflag [#allocation4], 1
    %422 = vsyncpa %s421, 1

</llo_original>
